<compile_context>
chip_gen: v6e
topology: v6e:2x2x1
jax: 0.10.0
libtpu: 0.0.40
codegen_flags: <defaults>
</compile_context>

<pallas_src>
import jax
import jax.numpy as jnp
from jax import lax
from jax.experimental import pallas as pl
from jax.experimental.pallas import tpu as pltpu

# --- synthetic config (small, consistent with the module) -------------------
VEC_SIZE = 32       # config['data']['vec_size']
OUTPUT_DIM = 4      # config['model']['output_dim']
FILTER_NUM = 8      # config['model']['filters']
N_GRAMS = (1, 3)    # odd gram sizes so every conv output has length == seq len
                    # (original code's (max_gram-min_gram+1)*filters is buggy;
                    #  feature_len here is len(N_GRAMS)*FILTER_NUM)
SEQ_LEN = 16
BATCH = 2
GMAX = max(N_GRAMS)
FEATURE_LEN = len(N_GRAMS) * FILTER_NUM


# ------------------------------ fused kernel --------------------------------
def _caml_kernel(x_ref, wc_ref, w1p_ref, bias_ref, o_ref):
    # x_ref:    [B*L, D]          input, batch folded into rows (sublanes)
    # wc_ref:   [GMAX*D, C]       packed conv weights (all grams, all filters)
    # w1p_ref:  [C, O+1]          fc1 and fc2 weights folded column-wise: [w1 | w2]
    # bias_ref: [3, max(C,O+1)]   row0 = conv bias, row1 = [fc1 bias | 0], row2 = [fc2 bias, 0..]
    # o_ref:    [B, O]
    BL, D = x_ref.shape
    B, O = o_ref.shape
    C = wc_ref.shape[1]
    L = BL // B
    off_c = GMAX // 2

    X = x_ref[...]                                                   # [B*L, D]
    pos = lax.broadcasted_iota(jnp.int32, (BL, D), 0) % L            # position within sequence

    # conv (all grams) + bias + ReLU + channel-concat == GMAX accumulated MXU matmuls against
    # the D-row blocks of wc.  Window block r needs x[l + r - off_c]: built with one XLU
    # sublane rotate + a per-batch boundary mask (no im2col, no slice+concat temps).
    acc = jnp.dot(X, wc_ref[off_c * D:(off_c + 1) * D, :],
                  preferred_element_type=jnp.float32)
    for r in range(GMAX):
        delta = r - off_c                                            # neighbour offset
        if delta == 0:
            continue
        xs = pltpu.roll(X, shift=(-delta) % BL, axis=0)              # xs[l] = x[l + delta]
        xs = jnp.where((pos + delta < 0) | (pos + delta > L - 1), 0.0, xs)
        acc = acc + jnp.dot(xs, wc_ref[r * D:(r + 1) * D, :],
                            preferred_element_type=jnp.float32)
    conv_out = jnp.maximum(acc + bias_ref[0:1, 0:C], 0.0)            # [B*L, C]

    # fc1 (attention logits) and fc2 (values) in one matmul: cols 0:O are logits, col O is v.
    h = (jnp.dot(conv_out, w1p_ref[...], preferred_element_type=jnp.float32)
         + bias_ref[1:2, 0:O + 1])                                   # [B*L, O+1]
    logits = h[:, 0:O]
    v = h[:, O:O + 1]

    # per-batch softmax over the sequence axis + attention contraction (static unroll, B tiny)
    rows = []
    for b in range(B):
        lg = logits[b * L:(b + 1) * L]                               # [L, O]
        vb = v[b * L:(b + 1) * L]                                    # [L, 1]
        m = jnp.max(lg, axis=0, keepdims=True)
        e = jnp.exp(lg - m)
        attn = e / jnp.sum(e, axis=0, keepdims=True)                 # exact softmax over L
        rows.append(jnp.sum(attn * vb, axis=0, keepdims=True))       # [1, O]
    out = jnp.concatenate(rows, axis=0) + bias_ref[2:3, 0:1]         # + fc2 bias (exact)
    o_ref[...] = jax.nn.sigmoid(out)                                 # single [B, O] store


# ------------------------------ packing --------------------------------------
def pack_params(convs, w1, b1, w2, b2):
    """Pack per-gram conv weights into one [GMAX*D, C] matrix (exact: zero rows for narrower
    odd grams), fold fc2 into fc1 column-wise, and gather all small biases into one slab."""
    D = convs[0][0].shape[1]
    C = sum(w.shape[-1] for w, _ in convs)
    O = w1.shape[-1]
    wc = jnp.zeros((GMAX * D, C), jnp.float32)
    bcs = []
    col = 0
    for (w, b) in convs:
        g, _, f = w.shape
        off = GMAX // 2 - g // 2       # center narrower (odd) grams inside the GMAX window
        for r in range(g):
            wc = wc.at[(off + r) * D:(off + r + 1) * D, col:col + f].set(w[r])
        bcs.append(b)
        col += f
    bc = jnp.concatenate(bcs, axis=1)                          # [1, C]
    w1p = jnp.concatenate([w1, w2], axis=1)                    # [C, O+1]  == [fc1 | fc2]
    W = max(C, O + 1)
    bias = jnp.zeros((3, W), jnp.float32)
    bias = bias.at[0, :C].set(bc[0])                           # conv bias
    bias = bias.at[1, :O].set(b1[0])                           # fc1 bias (col O stays 0 for v)
    bias = bias.at[2, 0].set(b2.reshape(-1)[0])                # fc2 bias (added post-contraction)
    return {"wc": wc, "w1p": w1p, "bias": bias}


# ------------------------------ wrapper --------------------------------------
@jax.jit
def caml_forward(x, packed):
    # x: [B, L, D]  ->  y: [B, OUTPUT_DIM], result: [B, OUTPUT_DIM] bool (torch.ge(y, 0.5))
    B, L, D = x.shape
    O = packed["w1p"].shape[-1] - 1
    C = packed["wc"].shape[-1]
    vm = pltpu.MemorySpace.VMEM
    flops = 2 * B * L * D * C * GMAX + 2 * B * L * C * (O + 1)
    bytes_accessed = 4 * (B * L * D + GMAX * D * C + C * (O + 1)
                          + 3 * max(C, O + 1) + B * O)
    y = pl.pallas_call(
        _caml_kernel,
        out_shape=jax.ShapeDtypeStruct((B, O), jnp.float32),
        in_specs=[
            pl.BlockSpec(memory_space=vm),    # x    [B*L, D]
            pl.BlockSpec(memory_space=vm),    # wc   [GMAX*D, C]
            pl.BlockSpec(memory_space=vm),    # w1p  [C, O+1]
            pl.BlockSpec(memory_space=vm),    # bias [3, max(C, O+1)]
        ],
        out_specs=pl.BlockSpec(memory_space=vm),
        cost_estimate=pl.CostEstimate(flops=flops,
                                      transcendentals=B * L * O + B * O,
                                      bytes_accessed=bytes_accessed),
    )(x.reshape(B * L, D), packed["wc"], packed["w1p"], packed["bias"])
    result = y >= 0.5
    return y, result


# ------------------------------ pure-JAX reference ---------------------------
def caml_ref(x, params):
    P = lax.Precision.HIGHEST
    feats = []
    B, L, D = x.shape
    for gram, (w, b) in zip(N_GRAMS, params["convs"]):
        pad = gram // 2
        xpad = jnp.pad(x, ((0, 0), (pad, pad), (0, 0)))
        out = jnp.zeros((B, L, w.shape[-1]), jnp.float32)
        for r in range(gram):
            out = out + jnp.einsum("bld,df->blf", xpad[:, r:r + L, :], w[r], precision=P)
        feats.append(jax.nn.relu(out + b[0]))
    co = jnp.concatenate(feats, axis=-1)
    logits = jnp.einsum("blc,co->blo", co, params["w1"], precision=P) + params["b1"][0]
    attn = jax.nn.softmax(logits, axis=1)
    ctx = jnp.einsum("blo,blc->boc", attn, co, precision=P)
    out = jnp.einsum("boc,cd->bod", ctx, params["w2"], precision=P)[..., 0] + params["b2"][0, 0]
    return jax.nn.sigmoid(out)


# ------------------------------------ main -----------------------------------
if __name__ == "__main__":
    key = jax.random.PRNGKey(0)
    keys = jax.random.split(key, 2 * len(N_GRAMS) + 5)

    convs = []
    for i, gram in enumerate(N_GRAMS):
        # torch Conv2d weight [F, 1, gram, D] -> stored here as [gram, D, F]
        w = 0.1 * jax.random.normal(keys[2 * i], (gram, VEC_SIZE, FILTER_NUM),
                                    dtype=jnp.float32)
        b = 0.1 * jax.random.normal(keys[2 * i + 1], (1, FILTER_NUM), dtype=jnp.float32)
        convs.append((w, b))

    params = {
        "convs": convs,
        "w1": 0.1 * jax.random.normal(keys[-5], (FEATURE_LEN, OUTPUT_DIM), dtype=jnp.float32),
        "b1": 0.1 * jax.random.normal(keys[-4], (1, OUTPUT_DIM), dtype=jnp.float32),
        "w2": 0.1 * jax.random.normal(keys[-3], (FEATURE_LEN, 1), dtype=jnp.float32),
        "b2": 0.1 * jax.random.normal(keys[-2], (1, 1), dtype=jnp.float32),
    }
    packed = pack_params(params["convs"], params["w1"], params["b1"],
                         params["w2"], params["b2"])

    x = jax.random.normal(keys[-1], (BATCH, SEQ_LEN, VEC_SIZE), dtype=jnp.float32)

    y, result = caml_forward(x, packed)
    y = jax.block_until_ready(y)
    result = jax.block_until_ready(result)

    y_ref = caml_ref(x, params)
    assert y.shape == (BATCH, OUTPUT_DIM)
    assert result.shape == (BATCH, OUTPUT_DIM)
    # Softmax is now exact (no approx reciprocal).  Remaining slack only covers possible
    # default-precision (bf16-pass) MXU matmul differences between the Mosaic kernel and the
    # HIGHEST-precision XLA reference path — 4x tighter than the previous 2e-3 bound.
    assert jnp.allclose(y, y_ref, atol=5e-4, rtol=5e-4), (y, y_ref)
    print("KERNEL_OK")
</pallas_src>

<mosaic_0001>
module attributes {stable_mosaic.version = 11 : i64} {
  func.func @_caml_kernel(%arg0: memref<32x32xf32, #tpu.memory_space<vmem>>, %arg1: memref<96x16xf32, #tpu.memory_space<vmem>>, %arg2: memref<16x5xf32, #tpu.memory_space<vmem>>, %arg3: memref<3x16xf32, #tpu.memory_space<vmem>>, %arg4: memref<2x4xf32, #tpu.memory_space<vmem>>) attributes {dimension_semantics = [], scalar_prefetch = 0 : i64, scratch_operands = 0 : i64, tpu.core_type = #tpu.core_type<tc>} {
    %c0 = arith.constant 0 : index
    %c0_0 = arith.constant 0 : index
    %0 = vector.load %arg0[%c0, %c0_0] : memref<32x32xf32, #tpu.memory_space<vmem>>, vector<32x32xf32>
    %1 = tpu.iota {dimensions = array<i32: 0>} : vector<32x32xi32>
    %c16_i32 = arith.constant 16 : i32
    %c0_i32 = arith.constant 0 : i32
    %2 = arith.cmpi eq, %c16_i32, %c0_i32 : i32
    %c1_i32 = arith.constant 1 : i32
    %3 = arith.select %2, %c1_i32, %c16_i32 : i32
    %4 = vector.broadcast %3 : i32 to vector<32x32xi32>
    %5 = arith.remsi %1, %4 : vector<32x32xi32>
    %c0_i32_1 = arith.constant 0 : i32
    %6 = vector.broadcast %c0_i32_1 : i32 to vector<32x32xi32>
    %7 = arith.cmpi ne, %5, %6 : vector<32x32xi32>
    %c0_i32_2 = arith.constant 0 : i32
    %8 = vector.broadcast %c0_i32_2 : i32 to vector<32x32xi32>
    %9 = arith.cmpi slt, %5, %8 : vector<32x32xi32>
    %c0_i32_3 = arith.constant 0 : i32
    %10 = arith.cmpi slt, %3, %c0_i32_3 : i32
    %11 = vector.broadcast %10 : i1 to vector<32x32xi1>
    %12 = vector.broadcast %11 : vector<32x32xi1> to vector<32x32xi1>
    %13 = arith.xori %9, %12 : vector<32x32xi1>
    %14 = arith.andi %13, %7 : vector<32x32xi1>
    %15 = vector.broadcast %3 : i32 to vector<32x32xi32>
    %16 = arith.addi %5, %15 : vector<32x32xi32>
    %17 = arith.select %14, %16, %5 : vector<32x32xi1>, vector<32x32xi32>
    %c32 = arith.constant 32 : index
    %c0_4 = arith.constant 0 : index
    %18 = vector.load %arg1[%c32, %c0_4] : memref<96x16xf32, #tpu.memory_space<vmem>>, vector<32x16xf32>
    %cst = arith.constant dense<0.000000e+00> : vector<32x16xf32>
    %19 = tpu.matmul %0, %18, %cst {dimension_numbers = #tpu.dot_dimension_numbers<[1], [0], [0], [1], [0, 0, 1, 1], [], []>} : vector<32x32xf32>, vector<32x16xf32>, vector<32x16xf32> -> vector<32x16xf32>
    %c1_i32_5 = arith.constant 1 : i32
    %20 = tpu.dynamic_rotate %0 by %c1_i32_5 dim 0 : vector<32x32xf32>, i32 -> vector<32x32xf32>
    %c-1_i32 = arith.constant -1 : i32
    %21 = vector.broadcast %c-1_i32 : i32 to vector<32x32xi32>
    %22 = arith.addi %17, %21 : vector<32x32xi32>
    %c0_i32_6 = arith.constant 0 : i32
    %23 = vector.broadcast %c0_i32_6 : i32 to vector<32x32xi32>
    %24 = arith.cmpi slt, %22, %23 : vector<32x32xi32>
    %c-1_i32_7 = arith.constant -1 : i32
    %25 = vector.broadcast %c-1_i32_7 : i32 to vector<32x32xi32>
    %26 = arith.addi %17, %25 : vector<32x32xi32>
    %c15_i32 = arith.constant 15 : i32
    %27 = vector.broadcast %c15_i32 : i32 to vector<32x32xi32>
    %28 = arith.cmpi sgt, %26, %27 : vector<32x32xi32>
    %29 = arith.ori %24, %28 : vector<32x32xi1>
    %cst_8 = arith.constant 0.000000e+00 : f32
    %30 = vector.broadcast %cst_8 : f32 to vector<32x32xf32>
    %31 = arith.select %29, %30, %20 : vector<32x32xi1>, vector<32x32xf32>
    %c0_9 = arith.constant 0 : index
    %c0_10 = arith.constant 0 : index
    %32 = vector.load %arg1[%c0_9, %c0_10] : memref<96x16xf32, #tpu.memory_space<vmem>>, vector<32x16xf32>
    %cst_11 = arith.constant dense<0.000000e+00> : vector<32x16xf32>
    %33 = tpu.matmul %31, %32, %cst_11 {dimension_numbers = #tpu.dot_dimension_numbers<[1], [0], [0], [1], [0, 0, 1, 1], [], []>} : vector<32x32xf32>, vector<32x16xf32>, vector<32x16xf32> -> vector<32x16xf32>
    %34 = arith.addf %19, %33 : vector<32x16xf32>
    %c31_i32 = arith.constant 31 : i32
    %35 = tpu.dynamic_rotate %0 by %c31_i32 dim 0 : vector<32x32xf32>, i32 -> vector<32x32xf32>
    %c1_i32_12 = arith.constant 1 : i32
    %36 = vector.broadcast %c1_i32_12 : i32 to vector<32x32xi32>
    %37 = arith.addi %17, %36 : vector<32x32xi32>
    %c0_i32_13 = arith.constant 0 : i32
    %38 = vector.broadcast %c0_i32_13 : i32 to vector<32x32xi32>
    %39 = arith.cmpi slt, %37, %38 : vector<32x32xi32>
    %c1_i32_14 = arith.constant 1 : i32
    %40 = vector.broadcast %c1_i32_14 : i32 to vector<32x32xi32>
    %41 = arith.addi %17, %40 : vector<32x32xi32>
    %c15_i32_15 = arith.constant 15 : i32
    %42 = vector.broadcast %c15_i32_15 : i32 to vector<32x32xi32>
    %43 = arith.cmpi sgt, %41, %42 : vector<32x32xi32>
    %44 = arith.ori %39, %43 : vector<32x32xi1>
    %cst_16 = arith.constant 0.000000e+00 : f32
    %45 = vector.broadcast %cst_16 : f32 to vector<32x32xf32>
    %46 = arith.select %44, %45, %35 : vector<32x32xi1>, vector<32x32xf32>
    %c64 = arith.constant 64 : index
    %c0_17 = arith.constant 0 : index
    %47 = vector.load %arg1[%c64, %c0_17] : memref<96x16xf32, #tpu.memory_space<vmem>>, vector<32x16xf32>
    %cst_18 = arith.constant dense<0.000000e+00> : vector<32x16xf32>
    %48 = tpu.matmul %46, %47, %cst_18 {dimension_numbers = #tpu.dot_dimension_numbers<[1], [0], [0], [1], [0, 0, 1, 1], [], []>} : vector<32x32xf32>, vector<32x16xf32>, vector<32x16xf32> -> vector<32x16xf32>
    %49 = arith.addf %34, %48 : vector<32x16xf32>
    %c0_19 = arith.constant 0 : index
    %c0_20 = arith.constant 0 : index
    %50 = vector.load %arg3[%c0_19, %c0_20] : memref<3x16xf32, #tpu.memory_space<vmem>>, vector<1x16xf32>
    %51 = vector.broadcast %50 : vector<1x16xf32> to vector<32x16xf32>
    %52 = arith.addf %49, %51 : vector<32x16xf32>
    %cst_21 = arith.constant 0.000000e+00 : f32
    %53 = vector.broadcast %cst_21 : f32 to vector<32x16xf32>
    %54 = arith.maximumf %52, %53 : vector<32x16xf32>
    %c0_22 = arith.constant 0 : index
    %c0_23 = arith.constant 0 : index
    %55 = vector.load %arg2[%c0_22, %c0_23] : memref<16x5xf32, #tpu.memory_space<vmem>>, vector<16x5xf32>
    %cst_24 = arith.constant dense<0.000000e+00> : vector<32x5xf32>
    %56 = tpu.matmul %54, %55, %cst_24 {dimension_numbers = #tpu.dot_dimension_numbers<[1], [0], [0], [1], [0, 0, 1, 1], [], []>} : vector<32x16xf32>, vector<16x5xf32>, vector<32x5xf32> -> vector<32x5xf32>
    %c1 = arith.constant 1 : index
    %c0_25 = arith.constant 0 : index
    %57 = vector.load %arg3[%c1, %c0_25] : memref<3x16xf32, #tpu.memory_space<vmem>>, vector<1x5xf32>
    %58 = vector.broadcast %57 : vector<1x5xf32> to vector<32x5xf32>
    %59 = arith.addf %56, %58 : vector<32x5xf32>
    %60 = vector.extract_strided_slice %59 {offsets = [0, 0], sizes = [32, 4], strides = [1, 1]} : vector<32x5xf32> to vector<32x4xf32>
    %61 = vector.extract_strided_slice %59 {offsets = [0, 4], sizes = [32, 1], strides = [1, 1]} : vector<32x5xf32> to vector<32x1xf32>
    %62 = vector.extract_strided_slice %60 {offsets = [0, 0], sizes = [16, 4], strides = [1, 1]} : vector<32x4xf32> to vector<16x4xf32>
    %63 = vector.extract_strided_slice %61 {offsets = [0, 0], sizes = [16, 1], strides = [1, 1]} : vector<32x1xf32> to vector<16x1xf32>
    %cst_26 = arith.constant dense<0xFF800000> : vector<4xf32>
    %64 = vector.multi_reduction <maximumf>, %62, %cst_26 [0] : vector<16x4xf32> to vector<4xf32>
    %65 = vector.shape_cast %64 : vector<4xf32> to vector<1x4xf32>
    %66 = vector.broadcast %65 : vector<1x4xf32> to vector<16x4xf32>
    %67 = arith.subf %62, %66 : vector<16x4xf32>
    %68 = math.exp %67 : vector<16x4xf32>
    %cst_27 = arith.constant dense<0.000000e+00> : vector<4xf32>
    %69 = vector.multi_reduction <add>, %68, %cst_27 [0] : vector<16x4xf32> to vector<4xf32>
    %70 = vector.shape_cast %69 : vector<4xf32> to vector<1x4xf32>
    %71 = vector.broadcast %70 : vector<1x4xf32> to vector<16x4xf32>
    %72 = arith.divf %68, %71 : vector<16x4xf32>
    %73 = vector.broadcast %63 : vector<16x1xf32> to vector<16x4xf32>
    %74 = arith.mulf %72, %73 : vector<16x4xf32>
    %cst_28 = arith.constant dense<0.000000e+00> : vector<4xf32>
    %75 = vector.multi_reduction <add>, %74, %cst_28 [0] : vector<16x4xf32> to vector<4xf32>
    %76 = vector.shape_cast %75 : vector<4xf32> to vector<1x4xf32>
    %77 = vector.extract_strided_slice %60 {offsets = [16, 0], sizes = [16, 4], strides = [1, 1]} : vector<32x4xf32> to vector<16x4xf32>
    %78 = vector.extract_strided_slice %61 {offsets = [16, 0], sizes = [16, 1], strides = [1, 1]} : vector<32x1xf32> to vector<16x1xf32>
    %cst_29 = arith.constant dense<0xFF800000> : vector<4xf32>
    %79 = vector.multi_reduction <maximumf>, %77, %cst_29 [0] : vector<16x4xf32> to vector<4xf32>
    %80 = vector.shape_cast %79 : vector<4xf32> to vector<1x4xf32>
    %81 = vector.broadcast %80 : vector<1x4xf32> to vector<16x4xf32>
    %82 = arith.subf %77, %81 : vector<16x4xf32>
    %83 = math.exp %82 : vector<16x4xf32>
    %cst_30 = arith.constant dense<0.000000e+00> : vector<4xf32>
    %84 = vector.multi_reduction <add>, %83, %cst_30 [0] : vector<16x4xf32> to vector<4xf32>
    %85 = vector.shape_cast %84 : vector<4xf32> to vector<1x4xf32>
    %86 = vector.broadcast %85 : vector<1x4xf32> to vector<16x4xf32>
    %87 = arith.divf %83, %86 : vector<16x4xf32>
    %88 = vector.broadcast %78 : vector<16x1xf32> to vector<16x4xf32>
    %89 = arith.mulf %87, %88 : vector<16x4xf32>
    %cst_31 = arith.constant dense<0.000000e+00> : vector<4xf32>
    %90 = vector.multi_reduction <add>, %89, %cst_31 [0] : vector<16x4xf32> to vector<4xf32>
    %91 = vector.shape_cast %90 : vector<4xf32> to vector<1x4xf32>
    %92 = tpu.concatenate %76, %91 in 0 : vector<1x4xf32>, vector<1x4xf32> -> vector<2x4xf32>
    %c2 = arith.constant 2 : index
    %c0_32 = arith.constant 0 : index
    %93 = vector.load %arg3[%c2, %c0_32] : memref<3x16xf32, #tpu.memory_space<vmem>>, vector<1x1xf32>
    %94 = vector.broadcast %93 : vector<1x1xf32> to vector<2x4xf32>
    %95 = arith.addf %92, %94 : vector<2x4xf32>
    %96 = arith.negf %95 : vector<2x4xf32>
    %97 = math.exp %96 : vector<2x4xf32>
    %cst_33 = arith.constant 1.000000e+00 : f32
    %98 = vector.broadcast %cst_33 : f32 to vector<2x4xf32>
    %99 = arith.addf %98, %97 : vector<2x4xf32>
    %100 = arith.divf %98, %99 : vector<2x4xf32>
    %c0_34 = arith.constant 0 : index
    %c0_35 = arith.constant 0 : index
    %101 = vector.load %arg4[%c0_34, %c0_35] : memref<2x4xf32, #tpu.memory_space<vmem>>, vector<2x4xf32>
    tpu.vector_store %arg4[%c0_34, %c0_35], %100 {strides = array<i32>} : memref<2x4xf32, #tpu.memory_space<vmem>>, vector<2x4xf32>,
    return
  }
}

</mosaic_0001>

<llo_original>
// kernel: caml_forward.1
$region0: #{caml_forward.1}
  #allocation0 [shape = 'u32[]', space=smem, size = 0x4, offset = 0x4, fixed_abs, tag = 'smem constant byte address 0x4 - core index']
  #allocation1 [shape = 'u32[144,128]{1,0:T(1,128)}', space=vmem, size = 0x12000, scoped, tag = 'internal scratch']
  %s0 = inlined_call_operand.vmem [shape: f32[32,32], index: 0, kind: input, shape index: {}]
  %s1 = inlined_call_operand.vmem [shape: f32[96,16], index: 1, kind: input, shape index: {}]
  %s2 = inlined_call_operand.vmem [shape: f32[16,5], index: 2, kind: input, shape index: {}]
  %s3 = inlined_call_operand.vmem [shape: f32[3,16], index: 3, kind: input, shape index: {}]
  %s4 = inlined_call_operand.vmem [shape: f32[2,4], index: 4, kind: output, shape index: {}]
  %s5 = sld [smem:[#allocation0]]
  $region26: #{caml_forward.1} parent=0
    _
  %s7 = ssub.s32 1, %s5
  %s8 = scalar_select 0, %s7, %s5
  // Predicated region
  $region2: #{caml_forward.1} parent=0 // pred_check
    _
  $region3: #{caml_forward.1} parent=0 // pred_check_branch
    %10 = sbr.rel (0) target = $region5
  $region4: #{caml_forward.1} parent=0 // pred_region
    _
  $region5: #{caml_forward.1} parent=0 // pred_fallthru
    _
  // Predicated region
  $region6: #{caml_forward.1} parent=0 // pred_check
    _
  $region7: #{caml_forward.1} parent=0 // pred_check_branch
    %12 = sbr.rel (0) target = $region9
  $region8: #{caml_forward.1} parent=0 // pred_region
    _
  $region9: #{caml_forward.1} parent=0 // pred_fallthru
    _
  // Predicated region
  $region10: #{caml_forward.1} parent=0 // pred_check
    _
  $region11: #{caml_forward.1} parent=0 // pred_check_branch
    %14 = sbr.rel (0) target = $region13
  $region12: #{caml_forward.1} parent=0 // pred_region
    _
  $region13: #{caml_forward.1} parent=0 // pred_fallthru
    _
  // Predicated region
  $region14: #{caml_forward.1} parent=0 // pred_check
    _
  $region15: #{caml_forward.1} parent=0 // pred_check_branch
    %16 = sbr.rel (0) target = $region17
  $region16: #{caml_forward.1} parent=0 // pred_region
    _
  $region17: #{caml_forward.1} parent=0 // pred_fallthru
    _
  %v17 = vld [vmem:[%s0] sm:$0xff]
  %v18 = vld [vmem:[%s0 + $0x8] sm:$0xff]
  %v19 = vld [vmem:[%s0 + $0x10] sm:$0xff]
  %v20 = vld [vmem:[%s0 + $0x18] sm:$0xff]
  %v21 = vlaneseq
  %v22 = vshrl.u32 %v21, 7
  %v23 = vadd.s32 %v22, 8
  %v24 = vadd.s32 %v22, 16
  %v25 = vadd.s32 %v22, 24
  %vm26 = vcmp.lt.s32.totalorder %v22, 0
  %v27 = vsub.s32 0, %v22
  %v28 = vsel %vm26, %v27, %v22
  %v29 = vshrl.u32 %v28, 4
  %v30 = vand.u32 %v28, 15
  %v31 = vsub.s32 0, %v30
  %v32 = vsel %vm26, %v31, %v30
  %vm33 = vcmp.lt.s32.totalorder %v23, 0
  %v34 = vsub.s32 0, %v23
  %v35 = vsel %vm33, %v34, %v23
  %v36 = vshrl.u32 %v35, 4
  %v37 = vand.u32 %v35, 15
  %v38 = vsub.s32 0, %v37
  %v39 = vsel %vm33, %v38, %v37
  %vm40 = vcmp.lt.s32.totalorder %v24, 0
  %v41 = vsub.s32 0, %v24
  %v42 = vsel %vm40, %v41, %v24
  %v43 = vshrl.u32 %v42, 4
  %v44 = vand.u32 %v42, 15
  %v45 = vsub.s32 0, %v44
  %v46 = vsel %vm40, %v45, %v44
  %vm47 = vcmp.lt.s32.totalorder %v25, 0
  %v48 = vsub.s32 0, %v25
  %v49 = vsel %vm47, %v48, %v25
  %v50 = vshrl.u32 %v49, 4
  %v51 = vand.u32 %v49, 15
  %v52 = vsub.s32 0, %v51
  %v53 = vsel %vm47, %v52, %v51
  %vm54 = vcmp.ne.s32.totalorder %v32, 0
  %vm55 = vcmp.ne.s32.totalorder %v39, 0
  %vm56 = vcmp.ne.s32.totalorder %v46, 0
  %vm57 = vcmp.ne.s32.totalorder %v53, 0
  %vm58 = vcmp.lt.s32.totalorder %v32, 0
  %vm59 = vcmp.lt.s32.totalorder %v39, 0
  %vm60 = vcmp.lt.s32.totalorder %v46, 0
  %vm61 = vcmp.lt.s32.totalorder %v53, 0
  %vm62 = vmand %vm58, %vm54
  %vm63 = vmand %vm59, %vm55
  %vm64 = vmand %vm60, %vm56
  %vm65 = vmand %vm61, %vm57
  %v66 = vadd.s32 %v32, 16
  %v67 = vadd.s32 %v39, 16
  %v68 = vadd.s32 %v46, 16
  %v69 = vadd.s32 %v53, 16
  %v70 = vsel %vm62, %v66, %v32
  %v71 = vsel %vm63, %v67, %v39
  %v72 = vsel %vm64, %v68, %v46
  %v73 = vsel %vm65, %v69, %v53
  %v74 = vld [vmem:[%s1 + $0x20] sm:$0xff]
  %v75 = vld [vmem:[%s1 + $0x28] sm:$0xff]
  %v76 = vld [vmem:[%s1 + $0x30] sm:$0xff]
  %v77 = vld [vmem:[%s1 + $0x38] sm:$0xff]
  %v78 = vrot.slane %v17, 7
  %v79 = vrot.slane %v18, 7
  %v80 = vrot.slane %v19, 7
  %v81 = vrot.slane %v20, 7
  %vm82 = vcmp.lt.s32.totalorder %v22, 1
  %v83 = vsel %vm82, %v80, %v81
  %v84 = vsel %vm82, %v79, %v80
  %v85 = vsel %vm82, %v78, %v79
  %v86 = vsel %vm82, %v81, %v78
  %v87 = vadd.s32 %v70, 4294967295
  %v88 = vadd.s32 %v71, 4294967295
  %v89 = vadd.s32 %v72, 4294967295
  %v90 = vadd.s32 %v73, 4294967295
  %vm91 = vcmp.lt.s32.totalorder %v87, 0
  %vm92 = vcmp.lt.s32.totalorder %v88, 0
  %vm93 = vcmp.lt.s32.totalorder %v89, 0
  %vm94 = vcmp.lt.s32.totalorder %v90, 0
  %vm95 = vcmp.gt.s32.totalorder %v87, 15
  %vm96 = vcmp.gt.s32.totalorder %v88, 15
  %vm97 = vcmp.gt.s32.totalorder %v89, 15
  %vm98 = vcmp.gt.s32.totalorder %v90, 15
  %vm99 = vmor %vm91, %vm95
  %vm100 = vmor %vm92, %vm96
  %vm101 = vmor %vm93, %vm97
  %vm102 = vmor %vm94, %vm98
  %v103 = vsel %vm99, 0.0, %v86
  %v104 = vsel %vm100, 0.0, %v85
  %v105 = vsel %vm101, 0.0, %v84
  %v106 = vsel %vm102, 0.0, %v83
  %v107 = vld [vmem:[%s1] sm:$0xff]
  %v108 = vld [vmem:[%s1 + $0x8] sm:$0xff]
  %v109 = vld [vmem:[%s1 + $0x10] sm:$0xff]
  %v110 = vld [vmem:[%s1 + $0x18] sm:$0xff]
  %vm111 = vcmask 261120
  %v113 = vsel %vm111, %v103, 0
  %v116 = vsel %vm111, %v104, 0
  %v119 = vsel %vm111, %v105, 0
  %v122 = vsel %vm111, %v106, 0
  %124 = vmatprep.subr.mxu0 0.0
  %125 = vmatpush1.msra.mxu0 0.0
  %126 = vmatprep.subr.mxu0 0.0
  %127 = vmatpush1.msra.mxu0 0.0
  %128 = vmatprep.subr.mxu0 0.0
  %129 = vmatpush1.msra.mxu0 0.0
  %130 = vmatprep.subr.mxu0 0.0
  %131 = vmatpush1.msra.mxu0 0.0
  %132 = vmatprep.subr.mxu0 0.0
  %133 = vmatpush1.msra.mxu0 0.0
  %134 = vmatprep.subr.mxu0 0.0
  %135 = vmatpush1.msra.mxu0 0.0
  %136 = vmatprep.subr.mxu0 0.0
  %137 = vmatpush1.msra.mxu0 0.0
  %138 = vmatprep.subr.mxu0 0.0
  %139 = vmatpush1.msra.mxu0 0.0
  %140 = vmatprep.subr.mxu0 0.0
  %141 = vmatpush1.msra.mxu0 0.0
  %142 = vmatprep.subr.mxu0 0.0
  %143 = vmatpush1.msra.mxu0 0.0
  %144 = vmatprep.subr.mxu0 0.0
  %145 = vmatpush1.msra.mxu0 0.0
  %146 = vmatprep.subr.mxu0 0.0
  %147 = vmatpush1.msra.mxu0 0.0
  %148 = vmatprep.subr.mxu0 0.0
  %149 = vmatpush1.msra.mxu0 %v110
  %150 = vmatprep.subr.mxu0 0.0
  %151 = vmatpush1.msra.mxu0 %v109
  %152 = vmatprep.subr.mxu0 0.0
  %153 = vmatpush1.msra.mxu0 %v108
  %154 = vmatprep.subr.mxu0 0.0
  %155 = vmatpush1.msra.mxu0 %v107
  %156 = vmatprep.subr.mxu0 0.0
  %157 = vmatpush2.msra.mxu0 0.0
  %158 = vmatprep.subr.mxu0 0.0
  %159 = vmatpush2.msra.mxu0 0.0
  %160 = vmatprep.subr.mxu0 0.0
  %161 = vmatpush2.msra.mxu0 0.0
  %162 = vmatprep.subr.mxu0 0.0
  %163 = vmatpush2.msra.mxu0 0.0
  %164 = vmatprep.subr.mxu0 0.0
  %165 = vmatpush2.msra.mxu0 0.0
  %166 = vmatprep.subr.mxu0 0.0
  %167 = vmatpush2.msra.mxu0 0.0
  %168 = vmatprep.subr.mxu0 0.0
  %169 = vmatpush2.msra.mxu0 0.0
  %170 = vmatprep.subr.mxu0 0.0
  %171 = vmatpush2.msra.mxu0 0.0
  %172 = vmatprep.subr.mxu0 0.0
  %173 = vmatpush2.msra.mxu0 0.0
  %174 = vmatprep.subr.mxu0 0.0
  %175 = vmatpush2.msra.mxu0 0.0
  %176 = vmatprep.subr.mxu0 0.0
  %177 = vmatpush2.msra.mxu0 0.0
  %178 = vmatprep.subr.mxu0 0.0
  %179 = vmatpush2.msra.mxu0 0.0
  %180 = vmatprep.subr.mxu0 0.0
  %181 = vmatpush2.msra.mxu0 0.0
  %182 = vmatprep.subr.mxu0 0.0
  %183 = vmatpush2.msra.mxu0 0.0
  %184 = vmatprep.subr.mxu0 0.0
  %185 = vmatpush2.msra.mxu0 0.0
  %186 = vmatprep.subr.mxu0 0.0
  %187 = vmatpush2.msra.mxu0 0.0
  %188 = vmatprep.mubr.f32.mxu0 0.0
  %189 = vmatmul.mubr.f32.gmra.mxu0 %v113
  %v190 = vpop.f32.mrf.mxu0
  %v191 = vadd.f32 0.0, %v190
  %v192 = vpop.f32.mrf.mxu0
  %193 = vmatprep.mubr.f32.mxu0 0.0
  %194 = vmatmul.mubr.f32.gmra.mxu0 %v116
  %v195 = vpop.f32.mrf.mxu0
  %v196 = vadd.f32 0.0, %v195
  %v197 = vpop.f32.mrf.mxu0
  %198 = vmatprep.mubr.f32.mxu0 0.0
  %199 = vmatmul.mubr.f32.gmra.mxu0 %v119
  %v200 = vpop.f32.mrf.mxu0
  %v201 = vadd.f32 0.0, %v200
  %v202 = vpop.f32.mrf.mxu0
  %203 = vmatprep.mubr.f32.mxu0 0.0
  %204 = vmatmul.mubr.f32.gmra.mxu0 %v122
  %v205 = vpop.f32.mrf.mxu0
  %v206 = vadd.f32 0.0, %v205
  %v207 = vpop.f32.mrf.mxu0
  %208 = vdwg.mxu0
  %v210 = vsel %vm111, %v17, 0
  %v213 = vsel %vm111, %v18, 0
  %v216 = vsel %vm111, %v19, 0
  %v219 = vsel %vm111, %v20, 0
  %221 = vmatprep.subr.mxu0 0.0
  %222 = vmatpush1.msra.mxu0 0.0
  %223 = vmatprep.subr.mxu0 0.0
  %224 = vmatpush1.msra.mxu0 0.0
  %225 = vmatprep.subr.mxu0 0.0
  %226 = vmatpush1.msra.mxu0 0.0
  %227 = vmatprep.subr.mxu0 0.0
  %228 = vmatpush1.msra.mxu0 0.0
  %229 = vmatprep.subr.mxu0 0.0
  %230 = vmatpush1.msra.mxu0 0.0
  %231 = vmatprep.subr.mxu0 0.0
  %232 = vmatpush1.msra.mxu0 0.0
  %233 = vmatprep.subr.mxu0 0.0
  %234 = vmatpush1.msra.mxu0 0.0
  %235 = vmatprep.subr.mxu0 0.0
  %236 = vmatpush1.msra.mxu0 0.0
  %237 = vmatprep.subr.mxu0 0.0
  %238 = vmatpush1.msra.mxu0 0.0
  %239 = vmatprep.subr.mxu0 0.0
  %240 = vmatpush1.msra.mxu0 0.0
  %241 = vmatprep.subr.mxu0 0.0
  %242 = vmatpush1.msra.mxu0 0.0
  %243 = vmatprep.subr.mxu0 0.0
  %244 = vmatpush1.msra.mxu0 0.0
  %245 = vmatprep.subr.mxu0 0.0
  %246 = vmatpush1.msra.mxu0 %v77
  %247 = vmatprep.subr.mxu0 0.0
  %248 = vmatpush1.msra.mxu0 %v76
  %249 = vmatprep.subr.mxu0 0.0
  %250 = vmatpush1.msra.mxu0 %v75
  %251 = vmatprep.subr.mxu0 0.0
  %252 = vmatpush1.msra.mxu0 %v74
  %253 = vmatprep.subr.mxu0 0.0
  %254 = vmatpush2.msra.mxu0 0.0
  %255 = vmatprep.subr.mxu0 0.0
  %256 = vmatpush2.msra.mxu0 0.0
  %257 = vmatprep.subr.mxu0 0.0
  %258 = vmatpush2.msra.mxu0 0.0
  %259 = vmatprep.subr.mxu0 0.0
  %260 = vmatpush2.msra.mxu0 0.0
  %261 = vmatprep.subr.mxu0 0.0
  %262 = vmatpush2.msra.mxu0 0.0
  %263 = vmatprep.subr.mxu0 0.0
  %264 = vmatpush2.msra.mxu0 0.0
  %265 = vmatprep.subr.mxu0 0.0
  %266 = vmatpush2.msra.mxu0 0.0
  %267 = vmatprep.subr.mxu0 0.0
  %268 = vmatpush2.msra.mxu0 0.0
  %269 = vmatprep.subr.mxu0 0.0
  %270 = vmatpush2.msra.mxu0 0.0
  %271 = vmatprep.subr.mxu0 0.0
  %272 = vmatpush2.msra.mxu0 0.0
  %273 = vmatprep.subr.mxu0 0.0
  %274 = vmatpush2.msra.mxu0 0.0
  %275 = vmatprep.subr.mxu0 0.0
  %276 = vmatpush2.msra.mxu0 0.0
  %277 = vmatprep.subr.mxu0 0.0
  %278 = vmatpush2.msra.mxu0 0.0
  %279 = vmatprep.subr.mxu0 0.0
  %280 = vmatpush2.msra.mxu0 0.0
  %281 = vmatprep.subr.mxu0 0.0
  %282 = vmatpush2.msra.mxu0 0.0
  %283 = vmatprep.subr.mxu0 0.0
  %284 = vmatpush2.msra.mxu0 0.0
  %285 = vmatprep.mubr.f32.mxu0 0.0
  %286 = vmatmul.mubr.f32.gmra.mxu0 %v210
  %v287 = vpop.f32.mrf.mxu0
  %v288 = vadd.f32 %v191, %v287
  %v289 = vpop.f32.mrf.mxu0
  %290 = vmatprep.mubr.f32.mxu0 0.0
  %291 = vmatmul.mubr.f32.gmra.mxu0 %v213
  %v292 = vpop.f32.mrf.mxu0
  %v293 = vadd.f32 %v196, %v292
  %v294 = vpop.f32.mrf.mxu0
  %295 = vmatprep.mubr.f32.mxu0 0.0
  %296 = vmatmul.mubr.f32.gmra.mxu0 %v216
  %v297 = vpop.f32.mrf.mxu0
  %v298 = vadd.f32 %v201, %v297
  %v299 = vpop.f32.mrf.mxu0
  %300 = vmatprep.mubr.f32.mxu0 0.0
  %301 = vmatmul.mubr.f32.gmra.mxu0 %v219
  %v302 = vpop.f32.mrf.mxu0
  %v303 = vadd.f32 %v206, %v302
  %v304 = vpop.f32.mrf.mxu0
  %305 = vdwg.mxu0
  %v306 = vrot.slane %v17, 1
  %v307 = vrot.slane %v18, 1
  %v308 = vrot.slane %v19, 1
  %v309 = vrot.slane %v20, 1
  %vm310 = vcmp.lt.s32.totalorder %v22, 7
  %v311 = vsel %vm310, %v308, %v309
  %v312 = vsel %vm310, %v307, %v308
  %v313 = vsel %vm310, %v306, %v307
  %v314 = vsel %vm310, %v309, %v306
  %v315 = vadd.s32 %v70, 1
  %v316 = vadd.s32 %v71, 1
  %v317 = vadd.s32 %v72, 1
  %v318 = vadd.s32 %v73, 1
  %vm319 = vcmp.lt.s32.totalorder %v315, 0
  %vm320 = vcmp.lt.s32.totalorder %v316, 0
  %vm321 = vcmp.lt.s32.totalorder %v317, 0
  %vm322 = vcmp.lt.s32.totalorder %v318, 0
  %vm323 = vcmp.gt.s32.totalorder %v315, 15
  %vm324 = vcmp.gt.s32.totalorder %v316, 15
  %vm325 = vcmp.gt.s32.totalorder %v317, 15
  %vm326 = vcmp.gt.s32.totalorder %v318, 15
  %vm327 = vmor %vm319, %vm323
  %vm328 = vmor %vm320, %vm324
  %vm329 = vmor %vm321, %vm325
  %vm330 = vmor %vm322, %vm326
  %v331 = vsel %vm327, 0.0, %v313
  %v332 = vsel %vm328, 0.0, %v312
  %v333 = vsel %vm329, 0.0, %v311
  %v334 = vsel %vm330, 0.0, %v314
  %v335 = vld [vmem:[%s1 + $0x40] sm:$0xff]
  %v336 = vld [vmem:[%s1 + $0x48] sm:$0xff]
  %v337 = vld [vmem:[%s1 + $0x50] sm:$0xff]
  %v338 = vld [vmem:[%s1 + $0x58] sm:$0xff]
  %v340 = vsel %vm111, %v331, 0
  %v343 = vsel %vm111, %v332, 0
  %v346 = vsel %vm111, %v333, 0
  %v349 = vsel %vm111, %v334, 0
  %351 = vmatprep.subr.mxu0 0.0
  %352 = vmatpush1.msra.mxu0 0.0
  %353 = vmatprep.subr.mxu0 0.0
  %354 = vmatpush1.msra.mxu0 0.0
  %355 = vmatprep.subr.mxu0 0.0
  %356 = vmatpush1.msra.mxu0 0.0
  %357 = vmatprep.subr.mxu0 0.0
  %358 = vmatpush1.msra.mxu0 0.0
  %359 = vmatprep.subr.mxu0 0.0
  %360 = vmatpush1.msra.mxu0 0.0
  %361 = vmatprep.subr.mxu0 0.0
  %362 = vmatpush1.msra.mxu0 0.0
  %363 = vmatprep.subr.mxu0 0.0
  %364 = vmatpush1.msra.mxu0 0.0
  %365 = vmatprep.subr.mxu0 0.0
  %366 = vmatpush1.msra.mxu0 0.0
  %367 = vmatprep.subr.mxu0 0.0
  %368 = vmatpush1.msra.mxu0 0.0
  %369 = vmatprep.subr.mxu0 0.0
  %370 = vmatpush1.msra.mxu0 0.0
  %371 = vmatprep.subr.mxu0 0.0
  %372 = vmatpush1.msra.mxu0 0.0
  %373 = vmatprep.subr.mxu0 0.0
  %374 = vmatpush1.msra.mxu0 0.0
  %375 = vmatprep.subr.mxu0 0.0
  %376 = vmatpush1.msra.mxu0 %v338
  %377 = vmatprep.subr.mxu0 0.0
  %378 = vmatpush1.msra.mxu0 %v337
  %379 = vmatprep.subr.mxu0 0.0
  %380 = vmatpush1.msra.mxu0 %v336
  %381 = vmatprep.subr.mxu0 0.0
  %382 = vmatpush1.msra.mxu0 %v335
  %383 = vmatprep.subr.mxu0 0.0
  %384 = vmatpush2.msra.mxu0 0.0
  %385 = vmatprep.subr.mxu0 0.0
  %386 = vmatpush2.msra.mxu0 0.0
  %387 = vmatprep.subr.mxu0 0.0
  %388 = vmatpush2.msra.mxu0 0.0
  %389 = vmatprep.subr.mxu0 0.0
  %390 = vmatpush2.msra.mxu0 0.0
  %391 = vmatprep.subr.mxu0 0.0
  %392 = vmatpush2.msra.mxu0 0.0
  %393 = vmatprep.subr.mxu0 0.0
  %394 = vmatpush2.msra.mxu0 0.0
  %395 = vmatprep.subr.mxu0 0.0
  %396 = vmatpush2.msra.mxu0 0.0
  %397 = vmatprep.subr.mxu0 0.0
  %398 = vmatpush2.msra.mxu0 0.0
  %399 = vmatprep.subr.mxu0 0.0
  %400 = vmatpush2.msra.mxu0 0.0
  %401 = vmatprep.subr.mxu0 0.0
  %402 = vmatpush2.msra.mxu0 0.0
  %403 = vmatprep.subr.mxu0 0.0
  %404 = vmatpush2.msra.mxu0 0.0
  %405 = vmatprep.subr.mxu0 0.0
  %406 = vmatpush2.msra.mxu0 0.0
  %407 = vmatprep.subr.mxu0 0.0
  %408 = vmatpush2.msra.mxu0 0.0
  %409 = vmatprep.subr.mxu0 0.0
  %410 = vmatpush2.msra.mxu0 0.0
  %411 = vmatprep.subr.mxu0 0.0
  %412 = vmatpush2.msra.mxu0 0.0
  %413 = vmatprep.subr.mxu0 0.0
  %414 = vmatpush2.msra.mxu0 0.0
  %415 = vmatprep.mubr.f32.mxu0 0.0
  %416 = vmatmul.mubr.f32.gmra.mxu0 %v340
  %v417 = vpop.f32.mrf.mxu0
  %v418 = vadd.f32 0.0, %v417
  %v419 = vpop.f32.mrf.mxu0
  %420 = vmatprep.mubr.f32.mxu0 0.0
  %421 = vmatmul.mubr.f32.gmra.mxu0 %v343
  %v422 = vpop.f32.mrf.mxu0
  %v423 = vadd.f32 0.0, %v422
  %v424 = vpop.f32.mrf.mxu0
  %425 = vmatprep.mubr.f32.mxu0 0.0
  %426 = vmatmul.mubr.f32.gmra.mxu0 %v346
  %v427 = vpop.f32.mrf.mxu0
  %v428 = vadd.f32 0.0, %v427
  %v429 = vpop.f32.mrf.mxu0
  %430 = vmatprep.mubr.f32.mxu0 0.0
  %431 = vmatmul.mubr.f32.gmra.mxu0 %v349
  %v432 = vpop.f32.mrf.mxu0
  %v433 = vadd.f32 0.0, %v432
  %v434 = vpop.f32.mrf.mxu0
  %435 = vdwg.mxu0
  %v436 = vadd.f32 %v288, %v418
  %v437 = vadd.f32 %v293, %v423
  %v438 = vadd.f32 %v298, %v428
  %v439 = vadd.f32 %v303, %v433
  %v440 = vld [vmem:[%s3] sm:$0x1]
  %v441 = vlaneseq
  %v442 = vshrl.u32 %v441, 7
  %v443 = vsub.s32 0, %v442
  %v444 = vrot.slane %v440, %v443
  %v445 = vadd.f32 %v436, %v444
  %v446 = vadd.f32 %v437, %v444
  %v447 = vadd.f32 %v438, %v444
  %v448 = vadd.f32 %v439, %v444
  %v449 = vmax.f32 %v445, 0.0
  %v450 = vmax.f32 %v446, 0.0
  %v451 = vmax.f32 %v447, 0.0
  %v452 = vmax.f32 %v448, 0.0
  %v453 = vld [vmem:[%s2] sm:$0xff]
  %v454 = vld [vmem:[%s2 + $0x8] sm:$0xff]
  %v455 = vld [vmem:[%s3 + $0x1] sm:$0x1]
  %v456 = vlaneseq
  %v457 = vshrl.u32 %v456, 7
  %v458 = vsub.s32 0, %v457
  %v459 = vrot.slane %v455, %v458
  %vm460 = vcmask 130048
  %v462 = vsel %vm460, %v449, 0
  %v465 = vsel %vm460, %v450, 0
  %v468 = vsel %vm460, %v451, 0
  %v471 = vsel %vm460, %v452, 0
  %473 = vmatprep.subr.mxu0 0.0
  %474 = vmatpush1.msra.mxu0 0.0
  %475 = vmatprep.subr.mxu0 0.0
  %476 = vmatpush1.msra.mxu0 0.0
  %477 = vmatprep.subr.mxu0 0.0
  %478 = vmatpush1.msra.mxu0 0.0
  %479 = vmatprep.subr.mxu0 0.0
  %480 = vmatpush1.msra.mxu0 0.0
  %481 = vmatprep.subr.mxu0 0.0
  %482 = vmatpush1.msra.mxu0 0.0
  %483 = vmatprep.subr.mxu0 0.0
  %484 = vmatpush1.msra.mxu0 0.0
  %485 = vmatprep.subr.mxu0 0.0
  %486 = vmatpush1.msra.mxu0 0.0
  %487 = vmatprep.subr.mxu0 0.0
  %488 = vmatpush1.msra.mxu0 0.0
  %489 = vmatprep.subr.mxu0 0.0
  %490 = vmatpush1.msra.mxu0 0.0
  %491 = vmatprep.subr.mxu0 0.0
  %492 = vmatpush1.msra.mxu0 0.0
  %493 = vmatprep.subr.mxu0 0.0
  %494 = vmatpush1.msra.mxu0 0.0
  %495 = vmatprep.subr.mxu0 0.0
  %496 = vmatpush1.msra.mxu0 0.0
  %497 = vmatprep.subr.mxu0 0.0
  %498 = vmatpush1.msra.mxu0 0.0
  %499 = vmatprep.subr.mxu0 0.0
  %500 = vmatpush1.msra.mxu0 0.0
  %501 = vmatprep.subr.mxu0 0.0
  %502 = vmatpush1.msra.mxu0 %v454
  %503 = vmatprep.subr.mxu0 0.0
  %504 = vmatpush1.msra.mxu0 %v453
  %505 = vmatprep.subr.mxu0 0.0
  %506 = vmatpush2.msra.mxu0 0.0
  %507 = vmatprep.subr.mxu0 0.0
  %508 = vmatpush2.msra.mxu0 0.0
  %509 = vmatprep.subr.mxu0 0.0
  %510 = vmatpush2.msra.mxu0 0.0
  %511 = vmatprep.subr.mxu0 0.0
  %512 = vmatpush2.msra.mxu0 0.0
  %513 = vmatprep.subr.mxu0 0.0
  %514 = vmatpush2.msra.mxu0 0.0
  %515 = vmatprep.subr.mxu0 0.0
  %516 = vmatpush2.msra.mxu0 0.0
  %517 = vmatprep.subr.mxu0 0.0
  %518 = vmatpush2.msra.mxu0 0.0
  %519 = vmatprep.subr.mxu0 0.0
  %520 = vmatpush2.msra.mxu0 0.0
  %521 = vmatprep.subr.mxu0 0.0
  %522 = vmatpush2.msra.mxu0 0.0
  %523 = vmatprep.subr.mxu0 0.0
  %524 = vmatpush2.msra.mxu0 0.0
  %525 = vmatprep.subr.mxu0 0.0
  %526 = vmatpush2.msra.mxu0 0.0
  %527 = vmatprep.subr.mxu0 0.0
  %528 = vmatpush2.msra.mxu0 0.0
  %529 = vmatprep.subr.mxu0 0.0
  %530 = vmatpush2.msra.mxu0 0.0
  %531 = vmatprep.subr.mxu0 0.0
  %532 = vmatpush2.msra.mxu0 0.0
  %533 = vmatprep.subr.mxu0 0.0
  %534 = vmatpush2.msra.mxu0 0.0
  %535 = vmatprep.subr.mxu0 0.0
  %536 = vmatpush2.msra.mxu0 0.0
  %537 = vmatprep.mubr.f32.mxu0 0.0
  %538 = vmatmul.mubr.f32.gmra.mxu0 %v462
  %v539 = vpop.f32.mrf.mxu0
  %v540 = vadd.f32 %v459, %v539
  %v541 = vpop.f32.mrf.mxu0
  %542 = vmatprep.mubr.f32.mxu0 0.0
  %543 = vmatmul.mubr.f32.gmra.mxu0 %v465
  %v544 = vpop.f32.mrf.mxu0
  %v545 = vadd.f32 %v459, %v544
  %v546 = vpop.f32.mrf.mxu0
  %547 = vmatprep.mubr.f32.mxu0 0.0
  %548 = vmatmul.mubr.f32.gmra.mxu0 %v468
  %v549 = vpop.f32.mrf.mxu0
  %v550 = vadd.f32 %v459, %v549
  %v551 = vpop.f32.mrf.mxu0
  %552 = vmatprep.mubr.f32.mxu0 0.0
  %553 = vmatmul.mubr.f32.gmra.mxu0 %v471
  %v554 = vpop.f32.mrf.mxu0
  %v555 = vadd.f32 %v459, %v554
  %v556 = vpop.f32.mrf.mxu0
  %557 = vdwg.mxu0
  %vm558 = vcmask 31744
  %v559 = vsel %vm558, %v540, -inf
  %v560 = vsel %vm558, %v545, -inf
  %v561 = vmax.f32 %v559, %v560
  %v562 = vrot.slane %v561, 4
  %v563 = vmax.f32 %v561, %v562
  %v564 = vrot.slane %v563, 2
  %v565 = vmax.f32 %v563, %v564
  %v566 = vrot.slane %v565, 1
  %v567 = vmax.f32 %v565, %v566
  %v568 = vsub.f32 %v540, %v567
  %v569 = vsub.f32 %v545, %v567
  %v570 = vmul.f32 %v568, 1.442695
  %v571 = vpow.pop %v570
  %v572 = vmul.f32 %v569, 1.442695
  %v573 = vpow.pop %v572
  %v574 = vsel %vm558, %v571, 0.0
  %v575 = vsel %vm558, %v573, 0.0
  %v576 = vadd.f32 %v574, %v575
  %v577 = vrot.slane %v576, 4
  %v578 = vadd.f32 %v576, %v577
  %v579 = vrot.slane %v578, 2
  %v580 = vadd.f32 %v578, %v579
  %v581 = vrot.slane %v580, 1
  %v582 = vadd.f32 %v580, %v581
  %v583 = vrcp.pop %v582
  %v584 = vmul.f32 %v571, %v583
  %v585 = vmul.f32 %v573, %v583
  %587 = vset.pattern.permute.xlu0 4
  %588 = vperm.xlu0 %587, %v540
  %v589 = vpop.permute.xlu0 %588
  %592 = vset.pattern.permute.xlu0 4
  %593 = vperm.xlu0 %592, %v545
  %v594 = vpop.permute.xlu0 %593
  %v596 = vmul.f32 %v584, %v589
  %v597 = vmul.f32 %v585, %v594
  %v598 = vsel %vm558, %v596, 0.0
  %v599 = vsel %vm558, %v597, 0.0
  %v600 = vadd.f32 %v598, %v599
  %v601 = vrot.slane %v600, 4
  %v602 = vadd.f32 %v600, %v601
  %v603 = vrot.slane %v602, 2
  %v604 = vadd.f32 %v602, %v603
  %v605 = vrot.slane %v604, 1
  %v606 = vadd.f32 %v604, %v605
  %v607 = vsel %vm558, %v550, -inf
  %v608 = vsel %vm558, %v555, -inf
  %v609 = vmax.f32 %v607, %v608
  %v610 = vrot.slane %v609, 4
  %v611 = vmax.f32 %v609, %v610
  %v612 = vrot.slane %v611, 2
  %v613 = vmax.f32 %v611, %v612
  %v614 = vrot.slane %v613, 1
  %v615 = vmax.f32 %v613, %v614
  %v616 = vsub.f32 %v550, %v615
  %v617 = vsub.f32 %v555, %v615
  %v618 = vmul.f32 %v616, 1.442695
  %v619 = vpow.pop %v618
  %v620 = vmul.f32 %v617, 1.442695
  %v621 = vpow.pop %v620
  %v622 = vsel %vm558, %v619, 0.0
  %v623 = vsel %vm558, %v621, 0.0
  %v624 = vadd.f32 %v622, %v623
  %v625 = vrot.slane %v624, 4
  %v626 = vadd.f32 %v624, %v625
  %v627 = vrot.slane %v626, 2
  %v628 = vadd.f32 %v626, %v627
  %v629 = vrot.slane %v628, 1
  %v630 = vadd.f32 %v628, %v629
  %v631 = vrcp.pop %v630
  %v632 = vmul.f32 %v619, %v631
  %v633 = vmul.f32 %v621, %v631
  %635 = vset.pattern.permute.xlu0 4
  %636 = vperm.xlu0 %635, %v550
  %v637 = vpop.permute.xlu0 %636
  %640 = vset.pattern.permute.xlu0 4
  %641 = vperm.xlu0 %640, %v555
  %v642 = vpop.permute.xlu0 %641
  %v644 = vmul.f32 %v632, %v637
  %v645 = vmul.f32 %v633, %v642
  %v646 = vsel %vm558, %v644, 0.0
  %v647 = vsel %vm558, %v645, 0.0
  %v648 = vadd.f32 %v646, %v647
  %v649 = vrot.slane %v648, 4
  %v650 = vadd.f32 %v648, %v649
  %v651 = vrot.slane %v650, 2
  %v652 = vadd.f32 %v650, %v651
  %v653 = vrot.slane %v652, 1
  %v654 = vadd.f32 %v652, %v653
  %vm655 = vcmask 1040384
  %v656 = vsel %vm655, %v606, %v654
  %v657 = vld [vmem:[%s3 + $0x2] sm:$0x1]
  %s659 = vtos %v657
  %v660 = vstv %s659
  %v662 = vadd.f32 %v656, %v660
  %v663 = vxor.u32 %v662, 2147483648
  %v664 = vmul.f32 %v663, 1.442695
  %v665 = vpow.pop %v664
  %v666 = vadd.f32 %v665, 1.0
  %v667 = vrcp.pop %v666
  %v668 = vmul.f32 1.0, %v667
  %vm669 = vcmask 25600
  %670 = vst.msk [vmem:[%s4] sm:$0x3] %vm669, %v668
  // Predicated region
  $region18: #{caml_forward.1} parent=0 // pred_check
    _
  $region19: #{caml_forward.1} parent=0 // pred_check_branch
    %672 = sbr.rel (0) target = $region21
  $region20: #{caml_forward.1} parent=0 // pred_region
    _
  $region21: #{caml_forward.1} parent=0 // pred_fallthru
    _
  // Predicated region
  $region22: #{caml_forward.1} parent=0 // pred_check
    _
  $region23: #{caml_forward.1} parent=0 // pred_check_branch
    %674 = sbr.rel (0) target = $region25
  $region24: #{caml_forward.1} parent=0 // pred_region
    _
  $region25: #{caml_forward.1} parent=0 // pred_fallthru
    _

</llo_original>
